<compile_context>
chip_gen: v7x
topology: tpu7x:2x2x1
jax: 0.10.0
libtpu: 0.0.40
codegen_flags: <defaults>
</compile_context>

<pallas_src>
import functools
import math
from collections import deque

import numpy as np
import jax
import jax.numpy as jnp
from jax.experimental import pallas as pl
from jax.experimental.pallas import tpu as pltpu


def _dkd_kernel(tgt_ref, ls_ref, lt_ref, conf_ref, tckd_ref, nckd_ref, *,
                inv_t_tckd, inv_t_nckd, tckd_scale, nckd_scale):
    TB, C = ls_ref.shape
    ls = ls_ref[...].astype(jnp.float32)            # student logits tile (TB, C)
    lt = lt_ref[...].astype(jnp.float32)            # teacher logits tile (TB, C)
    tgt = tgt_ref[...]                              # (TB, 1) int32

    class_ids = jax.lax.broadcasted_iota(jnp.int32, (TB, C), 1)
    gt_mask = class_ids == tgt                      # one-hot target mask

    def _scale(x, inv):                             # x / T as a constant multiply
        return x if inv == 1.0 else x * inv

    def row_exp(x):
        """Fused softmax front-end: s = x - rowmax, e = exp(s), Z = rowsum(e)."""
        m = jnp.max(x, axis=1, keepdims=True)
        s = x - m
        e = jnp.exp(s)
        z = jnp.sum(e, axis=1, keepdims=True)
        return s, e, z

    def masked_row_exp(x):
        """Softmax front-end over non-target lanes (target lane exactly zero)."""
        m = jnp.max(jnp.where(gt_mask, -jnp.inf, x), axis=1, keepdims=True)
        s = x - m
        e = jnp.where(gt_mask, 0.0, jnp.exp(s))
        z = jnp.sum(e, axis=1, keepdims=True)
        return s, e, z

    def gt_sum(e):
        return jnp.sum(jnp.where(gt_mask, e, 0.0), axis=1, keepdims=True)

    # ---- per-sample teacher confidence at the target class (T = 1) ----------
    s_t1, e_t1, z_t1 = row_exp(lt)
    g_t1 = gt_sum(e_t1)
    conf_ref[...] = g_t1 / z_t1                     # per-row divide only

    # ---- TCKD: binary (target vs. rest) KL divergence ------------------------
    if inv_t_tckd == 1.0:                           # T_tckd == 1: reuse conf pass
        s_tt, e_tt, z_tt, g_tt = s_t1, e_t1, z_t1, g_t1
    else:
        s_tt, e_tt, z_tt = row_exp(_scale(lt, inv_t_tckd))
        g_tt = gt_sum(e_tt)
    s_st, e_st, z_st = row_exp(_scale(ls, inv_t_tckd))
    g_st = gt_sum(e_st)

    # No full softmax needed: p_gt = Z_gt/Z, p_other = (Z - Z_gt)/Z  (>= 0).
    pt_gt = g_tt / z_tt
    pt_ot = (z_tt - g_tt) / z_tt
    ps_gt = g_st / z_st
    ps_ot = (z_st - g_st) / z_st

    def kl_term(p, q):
        # matches torch.F.kl_div (xlogy): zero contribution where teacher prob is 0
        return jnp.where(p > 0.0, p * (jnp.log(p) - jnp.log(q)), 0.0)

    tckd_row = kl_term(pt_gt, ps_gt) + kl_term(pt_ot, ps_ot)     # (TB, 1)
    tckd_ref[...] = tckd_row * tckd_scale           # scale includes T^2 / B_total

    # ---- NCKD: KL over non-target classes ------------------------------------
    # Exact target suppression (zero the target lane after exp) instead of the
    # reference's approximate `- 1000 * gt` offset: equal within f32 tolerance,
    # saves two (TB,C) mul/sub passes, and enables exp-pass reuse below.
    # Note: the reuse branches keep the unmasked row-max shift; this is exact
    # unless non-target exps all underflow (logit gap > ~88 in f32) — never the
    # case for softmax-trained teachers/students.
    if inv_t_nckd == inv_t_tckd:
        # reuse both TCKD front-ends (teacher and student): 2 exp passes saved
        s2t, z2t = s_tt, z_tt - g_tt
        e2t = jnp.where(gt_mask, 0.0, e_tt)
        s2s, z2s = s_st, z_st - g_st
    elif inv_t_nckd == 1.0:
        # teacher reuses the confidence pass; student needs one fresh exp
        s2t, z2t = s_t1, z_t1 - g_t1
        e2t = jnp.where(gt_mask, 0.0, e_t1)
        s2s, _, z2s = masked_row_exp(ls)
    else:
        s2t, e2t, z2t = masked_row_exp(_scale(lt, inv_t_nckd))
        s2s, _, z2s = masked_row_exp(_scale(ls, inv_t_nckd))

    pt2 = e2t * (1.0 / z2t)                         # per-row recip, broadcast mult
    # log_pt2 - log_ps2 = (s2t - s2s) + (log Z_s - log Z_t)   (per-row logs only)
    diff = (s2t - s2s) + (jnp.log(z2s) - jnp.log(z2t))
    nckd_elem = jnp.where(pt2 > 0.0, pt2 * diff, 0.0)
    nckd_ref[...] = jnp.sum(nckd_elem, axis=1, keepdims=True) * nckd_scale


def _vmem_budget_bytes():
    """Generation-aware VMEM budget with headroom for compiler scratch.

    v5e/v6e have 128 MiB VMEM per TensorCore, v7x only 64 MiB.  If the query
    fails we fall back to the v7x-safe 48 MiB budget.
    """
    mib = 1024 * 1024
    try:
        cap = int(pltpu.get_tpu_info().vmem_capacity_bytes)
    except Exception:
        cap = 64 * mib
    return max(32 * mib, min(cap - 16 * mib, int(0.75 * cap)))


def _pick_tile_b(B, C, in_dtype_bytes, vmem_budget, buffer_count=2):
    """Largest aligned batch tile whose pipelined footprint fits the VMEM budget.

    Footprint per grid step ~= 2 logit inputs x buffer_count pipeline buffers
    (input dtype) + ~6 live f32 (tile_b, C) intermediates in the kernel body
    + tiny row-shaped in/outs.
    """
    def fits(tb):
        block = tb * C
        inputs = 2 * buffer_count * block * in_dtype_bytes
        scratch = 6 * block * 4
        rows = 4 * 2 * tb * 4
        return inputs + scratch + rows <= vmem_budget

    candidates = [tb for tb in (2048, 1024, 512, 256, 128, 64, 32, 16, 8)
                  if B % tb == 0]
    # v7x has 2 TensorCores: keep >= 2 grid steps so the "parallel" batch axis
    # can actually be sharded across them (no-op for single-TC v5e/v6e).
    if B >= 16:
        candidates = [tb for tb in candidates if B // tb >= 2]
    for tb in candidates:
        if fits(tb):
            return tb
    if candidates:
        # nothing fits (extreme C): take the smallest tile and hope for the best
        # TODO(synk): for vocabulary-scale C (>~400k classes at f32 even at
        # tile_b=8) add a second "arbitrary" grid axis over C chunks with an
        # online-softmax formulation; not needed at ImageNet-scale class counts.
        return candidates[-1]
    return B   # odd / tiny batch: one full-batch tile (block == full dims)


def dkd_losses(logits_student, logits_teacher, target,
               temperature_tckd=1.0, temperature_nckd=1.0, tile_b=None,
               compute_dtype=None, buffer_count=2):
    """Returns (tckd_loss, nckd_loss, per-sample teacher confidences).

    `compute_dtype=jnp.bfloat16` casts the logits before the kernel (halves the
    HBM read bytes of the two (B,C) tensors; the math stays f32 in-kernel).
    `buffer_count` deepens the input pipeline (pl.Buffered) if DMA is exposed.
    """
    if compute_dtype is not None:
        logits_student = logits_student.astype(compute_dtype)
        logits_teacher = logits_teacher.astype(compute_dtype)

    B, C = logits_student.shape
    in_bytes = jnp.dtype(logits_student.dtype).itemsize
    vmem_budget = _vmem_budget_bytes()
    if tile_b is None:
        tile_b = _pick_tile_b(B, C, in_bytes, vmem_budget, buffer_count)
    assert B % tile_b == 0 and (tile_b % 8 == 0 or tile_b == B), \
        "tile_b must divide B and be a multiple of 8 (or the full batch)"
    num_tiles = B // tile_b
    target2d = target.reshape(B, 1).astype(jnp.int32)

    kernel = functools.partial(
        _dkd_kernel,
        inv_t_tckd=1.0 / float(temperature_tckd),
        inv_t_nckd=1.0 / float(temperature_nckd),
        tckd_scale=float(temperature_tckd) ** 2 / B,   # divide by FULL batch here
        nckd_scale=float(temperature_nckd) ** 2 / B,
    )

    row_spec = pl.BlockSpec((tile_b, 1), lambda i: (i, 0))
    if buffer_count == 2:
        mat_spec = pl.BlockSpec((tile_b, C), lambda i: (i, 0))
    else:
        mat_spec = pl.BlockSpec((tile_b, C), lambda i: (i, 0),
                                pipeline_mode=pl.Buffered(buffer_count))
    row_shape = jax.ShapeDtypeStruct((B, 1), jnp.float32)

    conf, tckd_rows, nckd_rows = pl.pallas_call(
        kernel,
        grid=(num_tiles,),
        in_specs=[row_spec, mat_spec, mat_spec],
        out_specs=(row_spec, row_spec, row_spec),
        out_shape=(row_shape, row_shape, row_shape),
        compiler_params=pltpu.CompilerParams(
            dimension_semantics=("parallel",),        # per-tile outputs -> v7x 2-TC
            vmem_limit_bytes=vmem_budget),
    )(target2d, logits_student, logits_teacher)

    # per-row partial losses -> scalar (tiny XLA reduce; keeps grid parallel)
    return jnp.sum(tckd_rows), jnp.sum(nckd_rows), conf[:, 0]


def _dkd_reference(ls, lt, target, t1, t2):
    """Pure-JAX reference mirroring the PyTorch math (for in-script validation)."""
    B, C = ls.shape
    gt = jax.nn.one_hot(target, C, dtype=jnp.float32)
    other = 1.0 - gt
    conf = jnp.sum(jax.nn.softmax(lt, axis=1) * gt, axis=1)
    ps = jax.nn.softmax(ls / t1, axis=1)
    pt = jax.nn.softmax(lt / t1, axis=1)
    ps2 = jnp.stack([jnp.sum(ps * gt, 1), jnp.sum(ps * other, 1)], 1)
    pt2 = jnp.stack([jnp.sum(pt * gt, 1), jnp.sum(pt * other, 1)], 1)
    kl = jnp.where(pt2 > 0, pt2 * (jnp.log(pt2) - jnp.log(ps2)), 0.0)
    tckd = jnp.sum(kl) * t1 ** 2 / B
    lt2 = lt / t2 - 1000.0 * gt
    ls2 = ls / t2 - 1000.0 * gt
    p_t = jax.nn.softmax(lt2, 1)
    nckd_e = jnp.where(p_t > 0,
                       p_t * (jax.nn.log_softmax(lt2, 1) - jax.nn.log_softmax(ls2, 1)),
                       0.0)
    nckd = jnp.sum(nckd_e) * t2 ** 2 / B
    return tckd, nckd, conf


class DynamicDKD32:
    """Host-side stateful wrapper mirroring the PyTorch module."""

    def __init__(self, history_size=20000, base_alpha=1.0, base_beta=0.5,
                 logits_dtype=None):
        self.conf_history = deque(maxlen=history_size)
        self.base_alpha = base_alpha
        self.base_beta = base_beta
        self.ema_conf = None
        self.logits_dtype = logits_dtype   # e.g. jnp.bfloat16 for the HBM-BW win
        self.threshold_table = {0: (0.6, 0.65), 20000: (0.65, 0.7),
                                50000: (0.7, 0.75)}

    def _get_dynamic_threshold(self, step):
        for key in sorted(self.threshold_table.keys(), reverse=True):
            if step >= key:
                init_th, quantile = self.threshold_table[key]
                break
        if len(self.conf_history) < 20000:
            return init_th
        return np.quantile(self.conf_history, quantile)

    def __call__(self, logits_student, logits_teacher, target, epoch,
                 temperature_tckd=1.0, temperature_nckd=1.0, global_step=0):
        tckd, nckd, confs = dkd_losses(logits_student, logits_teacher, target,
                                       temperature_tckd, temperature_nckd,
                                       compute_dtype=self.logits_dtype)

        # host-side bookkeeping (matches .detach().cpu().numpy() in reference)
        # TODO(synk): deque history / EMA / np.quantile have no Pallas equivalent;
        # kept on the host exactly like the PyTorch reference.
        batch_confs = np.asarray(jax.device_get(confs), dtype=np.float64)
        self.conf_history.extend(batch_confs.tolist())
        current_batch_conf = float(np.mean(batch_confs))
        if self.ema_conf is None:
            self.ema_conf = current_batch_conf
        else:
            self.ema_conf = 0.9 * self.ema_conf + 0.1 * current_batch_conf

        threshold = float(self._get_dynamic_threshold(global_step))
        scale_factor = 12 * (1 - min(global_step / 100000, 1)) + 6
        delta = threshold - self.ema_conf
        adjust_ratio = 1.0 / (1.0 + math.exp(-scale_factor * delta))

        # TODO(synk): the reference clamps `alpha`/`beta` before they are ever
        # defined (NameError in the original source); we derive them from the
        # base weights scaled by adjust_ratio, then apply the reference clamps.
        alpha = float(np.clip(self.base_alpha * 2.0 * adjust_ratio, 0.5, 2.0))
        beta = float(np.clip(self.base_beta * 2.0 * adjust_ratio, 0.5, 1.0))

        loss = alpha * tckd + beta * nckd
        return loss


if __name__ == "__main__":
    key = jax.random.PRNGKey(0)
    B, C = 32, 128   # small batch, 128 classes (lane-aligned)
    k1, k2, k3 = jax.random.split(key, 3)
    logits_student = jax.random.normal(k1, (B, C), dtype=jnp.float32) * 2.0
    logits_teacher = jax.random.normal(k2, (B, C), dtype=jnp.float32) * 2.0
    target = jax.random.randint(k3, (B,), 0, C, dtype=jnp.int32)

    # 1) multi-tile grid (tile_b=8), all-fresh NCKD path (T_tckd != T_nckd != 1)
    tckd, nckd, conf = dkd_losses(logits_student, logits_teacher, target,
                                  temperature_tckd=2.0, temperature_nckd=4.0,
                                  tile_b=8)
    tckd, nckd, conf = jax.block_until_ready((tckd, nckd, conf))
    tckd_r, nckd_r, conf_r = _dkd_reference(logits_student, logits_teacher,
                                            target, 2.0, 4.0)
    np.testing.assert_allclose(np.asarray(tckd), np.asarray(tckd_r),
                               rtol=2e-3, atol=1e-5)
    np.testing.assert_allclose(np.asarray(nckd), np.asarray(nckd_r),
                               rtol=2e-3, atol=1e-5)
    np.testing.assert_allclose(np.asarray(conf), np.asarray(conf_r),
                               rtol=2e-3, atol=1e-6)

    # 2) auto tile size (>= 2 grid steps), full exp-reuse path (T_tckd == T_nckd == 1)
    tckd, nckd, conf = jax.block_until_ready(
        dkd_losses(logits_student, logits_teacher, target, 1.0, 1.0))
    tckd_r, nckd_r, conf_r = _dkd_reference(logits_student, logits_teacher,
                                            target, 1.0, 1.0)
    np.testing.assert_allclose(np.asarray(tckd), np.asarray(tckd_r),
                               rtol=2e-3, atol=1e-5)
    np.testing.assert_allclose(np.asarray(nckd), np.asarray(nckd_r),
                               rtol=2e-3, atol=1e-5)

    # 3) bf16 logits knob (halves HBM read bytes), TCKD-reuse path (T_tckd == T_nckd)
    tckd, nckd, conf = jax.block_until_ready(
        dkd_losses(logits_student, logits_teacher, target, 2.0, 2.0,
                   compute_dtype=jnp.bfloat16))
    ls_b = logits_student.astype(jnp.bfloat16).astype(jnp.float32)
    lt_b = logits_teacher.astype(jnp.bfloat16).astype(jnp.float32)
    tckd_r, nckd_r, conf_r = _dkd_reference(ls_b, lt_b, target, 2.0, 2.0)
    np.testing.assert_allclose(np.asarray(tckd), np.asarray(tckd_r),
                               rtol=5e-3, atol=1e-4)
    np.testing.assert_allclose(np.asarray(nckd), np.asarray(nckd_r),
                               rtol=5e-3, atol=1e-4)
    np.testing.assert_allclose(np.asarray(conf), np.asarray(conf_r),
                               rtol=2e-3, atol=1e-5)

    # 4) full module forward (host-side EMA / quantile bookkeeping)
    module = DynamicDKD32()
    loss = module(logits_student, logits_teacher, target, epoch=0,
                  temperature_tckd=1.0, temperature_nckd=1.0, global_step=0)
    loss = jax.block_until_ready(jnp.asarray(loss))
    assert np.isfinite(float(loss))
    print("KERNEL_OK")
</pallas_src>

<mosaic_0001>
module attributes {stable_mosaic.version = 11 : i64} {
  func.func @_dkd_kernel(%arg0: i32, %arg1: memref<8x1xi32, #tpu.memory_space<vmem>>, %arg2: memref<8x128xf32, #tpu.memory_space<vmem>>, %arg3: memref<8x128xf32, #tpu.memory_space<vmem>>, %arg4: memref<8x1xf32, #tpu.memory_space<vmem>>, %arg5: memref<8x1xf32, #tpu.memory_space<vmem>>, %arg6: memref<8x1xf32, #tpu.memory_space<vmem>>) attributes {dimension_semantics = [#tpu.dimension_semantics<parallel>], iteration_bounds = array<i64: 4>, scalar_prefetch = 0 : i64, scratch_operands = 0 : i64, tpu.core_type = #tpu.core_type<tc>, window_params = [{transform_indices = @transform_0, window_bounds = array<i64: 8, 1>}, {transform_indices = @transform_1, window_bounds = array<i64: 8, 128>}, {transform_indices = @transform_2, window_bounds = array<i64: 8, 128>}, {transform_indices = @transform_3, window_bounds = array<i64: 8, 1>}, {transform_indices = @transform_4, window_bounds = array<i64: 8, 1>}, {transform_indices = @transform_5, window_bounds = array<i64: 8, 1>}]} {
    %c0 = arith.constant 0 : index
    %c0_0 = arith.constant 0 : index
    %0 = vector.load %arg2[%c0, %c0_0] : memref<8x128xf32, #tpu.memory_space<vmem>>, vector<8x128xf32>
    %c0_1 = arith.constant 0 : index
    %c0_2 = arith.constant 0 : index
    %1 = vector.load %arg3[%c0_1, %c0_2] : memref<8x128xf32, #tpu.memory_space<vmem>>, vector<8x128xf32>
    %c0_3 = arith.constant 0 : index
    %c0_4 = arith.constant 0 : index
    %2 = vector.load %arg1[%c0_3, %c0_4] : memref<8x1xi32, #tpu.memory_space<vmem>>, vector<8x1xi32>
    %3 = tpu.iota {dimensions = array<i32: 1>} : vector<8x128xi32>
    %4 = vector.broadcast %2 : vector<8x1xi32> to vector<8x128xi32>
    %5 = arith.cmpi eq, %3, %4 : vector<8x128xi32>
    %cst = arith.constant dense<0xFF800000> : vector<8xf32>
    %6 = vector.multi_reduction <maximumf>, %1, %cst [1] : vector<8x128xf32> to vector<8xf32>
    %7 = vector.shape_cast %6 : vector<8xf32> to vector<8x1xf32>
    %8 = vector.broadcast %7 : vector<8x1xf32> to vector<8x128xf32>
    %9 = arith.subf %1, %8 : vector<8x128xf32>
    %10 = math.exp %9 : vector<8x128xf32>
    %cst_5 = arith.constant dense<0.000000e+00> : vector<8xf32>
    %11 = vector.multi_reduction <add>, %10, %cst_5 [1] : vector<8x128xf32> to vector<8xf32>
    %12 = vector.shape_cast %11 : vector<8xf32> to vector<8x1xf32>
    %cst_6 = arith.constant 0.000000e+00 : f32
    %13 = vector.broadcast %cst_6 : f32 to vector<8x128xf32>
    %14 = arith.select %5, %10, %13 : vector<8x128xi1>, vector<8x128xf32>
    %cst_7 = arith.constant dense<0.000000e+00> : vector<8xf32>
    %15 = vector.multi_reduction <add>, %14, %cst_7 [1] : vector<8x128xf32> to vector<8xf32>
    %16 = vector.shape_cast %15 : vector<8xf32> to vector<8x1xf32>
    %17 = arith.divf %16, %12 : vector<8x1xf32>
    %c0_8 = arith.constant 0 : index
    %c0_9 = arith.constant 0 : index
    %18 = vector.load %arg4[%c0_8, %c0_9] : memref<8x1xf32, #tpu.memory_space<vmem>>, vector<8x1xf32>
    tpu.vector_store %arg4[%c0_8, %c0_9], %17 {strides = array<i32>} : memref<8x1xf32, #tpu.memory_space<vmem>>, vector<8x1xf32>,
    %cst_10 = arith.constant 5.000000e-01 : f32
    %19 = vector.broadcast %cst_10 : f32 to vector<8x128xf32>
    %20 = arith.mulf %1, %19 : vector<8x128xf32>
    %cst_11 = arith.constant dense<0xFF800000> : vector<8xf32>
    %21 = vector.multi_reduction <maximumf>, %20, %cst_11 [1] : vector<8x128xf32> to vector<8xf32>
    %22 = vector.shape_cast %21 : vector<8xf32> to vector<8x1xf32>
    %23 = vector.broadcast %22 : vector<8x1xf32> to vector<8x128xf32>
    %24 = arith.subf %20, %23 : vector<8x128xf32>
    %25 = math.exp %24 : vector<8x128xf32>
    %cst_12 = arith.constant dense<0.000000e+00> : vector<8xf32>
    %26 = vector.multi_reduction <add>, %25, %cst_12 [1] : vector<8x128xf32> to vector<8xf32>
    %27 = vector.shape_cast %26 : vector<8xf32> to vector<8x1xf32>
    %cst_13 = arith.constant 0.000000e+00 : f32
    %28 = vector.broadcast %cst_13 : f32 to vector<8x128xf32>
    %29 = arith.select %5, %25, %28 : vector<8x128xi1>, vector<8x128xf32>
    %cst_14 = arith.constant dense<0.000000e+00> : vector<8xf32>
    %30 = vector.multi_reduction <add>, %29, %cst_14 [1] : vector<8x128xf32> to vector<8xf32>
    %31 = vector.shape_cast %30 : vector<8xf32> to vector<8x1xf32>
    %cst_15 = arith.constant 5.000000e-01 : f32
    %32 = vector.broadcast %cst_15 : f32 to vector<8x128xf32>
    %33 = arith.mulf %0, %32 : vector<8x128xf32>
    %cst_16 = arith.constant dense<0xFF800000> : vector<8xf32>
    %34 = vector.multi_reduction <maximumf>, %33, %cst_16 [1] : vector<8x128xf32> to vector<8xf32>
    %35 = vector.shape_cast %34 : vector<8xf32> to vector<8x1xf32>
    %36 = vector.broadcast %35 : vector<8x1xf32> to vector<8x128xf32>
    %37 = arith.subf %33, %36 : vector<8x128xf32>
    %38 = math.exp %37 : vector<8x128xf32>
    %cst_17 = arith.constant dense<0.000000e+00> : vector<8xf32>
    %39 = vector.multi_reduction <add>, %38, %cst_17 [1] : vector<8x128xf32> to vector<8xf32>
    %40 = vector.shape_cast %39 : vector<8xf32> to vector<8x1xf32>
    %cst_18 = arith.constant 0.000000e+00 : f32
    %41 = vector.broadcast %cst_18 : f32 to vector<8x128xf32>
    %42 = arith.select %5, %38, %41 : vector<8x128xi1>, vector<8x128xf32>
    %cst_19 = arith.constant dense<0.000000e+00> : vector<8xf32>
    %43 = vector.multi_reduction <add>, %42, %cst_19 [1] : vector<8x128xf32> to vector<8xf32>
    %44 = vector.shape_cast %43 : vector<8xf32> to vector<8x1xf32>
    %45 = arith.divf %31, %27 : vector<8x1xf32>
    %46 = arith.subf %27, %31 : vector<8x1xf32>
    %47 = arith.divf %46, %27 : vector<8x1xf32>
    %48 = arith.divf %44, %40 : vector<8x1xf32>
    %49 = arith.subf %40, %44 : vector<8x1xf32>
    %50 = arith.divf %49, %40 : vector<8x1xf32>
    %cst_20 = arith.constant 0.000000e+00 : f32
    %51 = vector.broadcast %cst_20 : f32 to vector<8x1xf32>
    %52 = arith.cmpf ogt, %45, %51 : vector<8x1xf32>
    %53 = math.log %45 : vector<8x1xf32>
    %54 = math.log %48 : vector<8x1xf32>
    %55 = arith.subf %53, %54 : vector<8x1xf32>
    %56 = arith.mulf %45, %55 : vector<8x1xf32>
    %cst_21 = arith.constant 0.000000e+00 : f32
    %57 = vector.broadcast %cst_21 : f32 to vector<8x1xf32>
    %58 = arith.select %52, %56, %57 : vector<8x1xi1>, vector<8x1xf32>
    %cst_22 = arith.constant 0.000000e+00 : f32
    %59 = vector.broadcast %cst_22 : f32 to vector<8x1xf32>
    %60 = arith.cmpf ogt, %47, %59 : vector<8x1xf32>
    %61 = math.log %47 : vector<8x1xf32>
    %62 = math.log %50 : vector<8x1xf32>
    %63 = arith.subf %61, %62 : vector<8x1xf32>
    %64 = arith.mulf %47, %63 : vector<8x1xf32>
    %cst_23 = arith.constant 0.000000e+00 : f32
    %65 = vector.broadcast %cst_23 : f32 to vector<8x1xf32>
    %66 = arith.select %60, %64, %65 : vector<8x1xi1>, vector<8x1xf32>
    %67 = arith.addf %58, %66 : vector<8x1xf32>
    %cst_24 = arith.constant 1.250000e-01 : f32
    %68 = vector.broadcast %cst_24 : f32 to vector<8x1xf32>
    %69 = arith.mulf %67, %68 : vector<8x1xf32>
    %c0_25 = arith.constant 0 : index
    %c0_26 = arith.constant 0 : index
    %70 = vector.load %arg5[%c0_25, %c0_26] : memref<8x1xf32, #tpu.memory_space<vmem>>, vector<8x1xf32>
    tpu.vector_store %arg5[%c0_25, %c0_26], %69 {strides = array<i32>} : memref<8x1xf32, #tpu.memory_space<vmem>>, vector<8x1xf32>,
    %cst_27 = arith.constant 2.500000e-01 : f32
    %71 = vector.broadcast %cst_27 : f32 to vector<8x128xf32>
    %72 = arith.mulf %1, %71 : vector<8x128xf32>
    %cst_28 = arith.constant 0xFF800000 : f32
    %73 = vector.broadcast %cst_28 : f32 to vector<8x128xf32>
    %74 = arith.select %5, %73, %72 : vector<8x128xi1>, vector<8x128xf32>
    %cst_29 = arith.constant dense<0xFF800000> : vector<8xf32>
    %75 = vector.multi_reduction <maximumf>, %74, %cst_29 [1] : vector<8x128xf32> to vector<8xf32>
    %76 = vector.shape_cast %75 : vector<8xf32> to vector<8x1xf32>
    %77 = vector.broadcast %76 : vector<8x1xf32> to vector<8x128xf32>
    %78 = arith.subf %72, %77 : vector<8x128xf32>
    %79 = math.exp %78 : vector<8x128xf32>
    %cst_30 = arith.constant 0.000000e+00 : f32
    %80 = vector.broadcast %cst_30 : f32 to vector<8x128xf32>
    %81 = arith.select %5, %80, %79 : vector<8x128xi1>, vector<8x128xf32>
    %cst_31 = arith.constant dense<0.000000e+00> : vector<8xf32>
    %82 = vector.multi_reduction <add>, %81, %cst_31 [1] : vector<8x128xf32> to vector<8xf32>
    %83 = vector.shape_cast %82 : vector<8xf32> to vector<8x1xf32>
    %cst_32 = arith.constant 2.500000e-01 : f32
    %84 = vector.broadcast %cst_32 : f32 to vector<8x128xf32>
    %85 = arith.mulf %0, %84 : vector<8x128xf32>
    %cst_33 = arith.constant 0xFF800000 : f32
    %86 = vector.broadcast %cst_33 : f32 to vector<8x128xf32>
    %87 = arith.select %5, %86, %85 : vector<8x128xi1>, vector<8x128xf32>
    %cst_34 = arith.constant dense<0xFF800000> : vector<8xf32>
    %88 = vector.multi_reduction <maximumf>, %87, %cst_34 [1] : vector<8x128xf32> to vector<8xf32>
    %89 = vector.shape_cast %88 : vector<8xf32> to vector<8x1xf32>
    %90 = vector.broadcast %89 : vector<8x1xf32> to vector<8x128xf32>
    %91 = arith.subf %85, %90 : vector<8x128xf32>
    %92 = math.exp %91 : vector<8x128xf32>
    %cst_35 = arith.constant 0.000000e+00 : f32
    %93 = vector.broadcast %cst_35 : f32 to vector<8x128xf32>
    %94 = arith.select %5, %93, %92 : vector<8x128xi1>, vector<8x128xf32>
    %cst_36 = arith.constant dense<0.000000e+00> : vector<8xf32>
    %95 = vector.multi_reduction <add>, %94, %cst_36 [1] : vector<8x128xf32> to vector<8xf32>
    %96 = vector.shape_cast %95 : vector<8xf32> to vector<8x1xf32>
    %cst_37 = arith.constant 1.000000e+00 : f32
    %97 = vector.broadcast %cst_37 : f32 to vector<8x1xf32>
    %98 = arith.divf %97, %83 : vector<8x1xf32>
    %99 = vector.broadcast %98 : vector<8x1xf32> to vector<8x128xf32>
    %100 = arith.mulf %81, %99 : vector<8x128xf32>
    %101 = arith.subf %78, %91 : vector<8x128xf32>
    %102 = math.log %96 : vector<8x1xf32>
    %103 = math.log %83 : vector<8x1xf32>
    %104 = arith.subf %102, %103 : vector<8x1xf32>
    %105 = vector.broadcast %104 : vector<8x1xf32> to vector<8x128xf32>
    %106 = arith.addf %101, %105 : vector<8x128xf32>
    %cst_38 = arith.constant 0.000000e+00 : f32
    %107 = vector.broadcast %cst_38 : f32 to vector<8x128xf32>
    %108 = arith.cmpf ogt, %100, %107 : vector<8x128xf32>
    %109 = arith.mulf %100, %106 : vector<8x128xf32>
    %cst_39 = arith.constant 0.000000e+00 : f32
    %110 = vector.broadcast %cst_39 : f32 to vector<8x128xf32>
    %111 = arith.select %108, %109, %110 : vector<8x128xi1>, vector<8x128xf32>
    %cst_40 = arith.constant dense<0.000000e+00> : vector<8xf32>
    %112 = vector.multi_reduction <add>, %111, %cst_40 [1] : vector<8x128xf32> to vector<8xf32>
    %113 = vector.shape_cast %112 : vector<8xf32> to vector<8x1xf32>
    %cst_41 = arith.constant 5.000000e-01 : f32
    %114 = vector.broadcast %cst_41 : f32 to vector<8x1xf32>
    %115 = arith.mulf %113, %114 : vector<8x1xf32>
    %c0_42 = arith.constant 0 : index
    %c0_43 = arith.constant 0 : index
    %116 = vector.load %arg6[%c0_42, %c0_43] : memref<8x1xf32, #tpu.memory_space<vmem>>, vector<8x1xf32>
    tpu.vector_store %arg6[%c0_42, %c0_43], %115 {strides = array<i32>} : memref<8x1xf32, #tpu.memory_space<vmem>>, vector<8x1xf32>,
    return
  }
  func.func @transform_0(%arg0: i32) -> (i32, i32) {
    %c0_i32 = arith.constant 0 : i32
    %c0_i32_0 = arith.constant 0 : i32
    return %arg0, %c0_i32 : i32, i32
  }
  func.func @transform_1(%arg0: i32) -> (i32, i32) {
    %c0_i32 = arith.constant 0 : i32
    %c0_i32_0 = arith.constant 0 : i32
    return %arg0, %c0_i32 : i32, i32
  }
  func.func @transform_2(%arg0: i32) -> (i32, i32) {
    %c0_i32 = arith.constant 0 : i32
    %c0_i32_0 = arith.constant 0 : i32
    return %arg0, %c0_i32 : i32, i32
  }
  func.func @transform_3(%arg0: i32) -> (i32, i32) {
    %c0_i32 = arith.constant 0 : i32
    %c0_i32_0 = arith.constant 0 : i32
    return %arg0, %c0_i32 : i32, i32
  }
  func.func @transform_4(%arg0: i32) -> (i32, i32) {
    %c0_i32 = arith.constant 0 : i32
    %c0_i32_0 = arith.constant 0 : i32
    return %arg0, %c0_i32 : i32, i32
  }
  func.func @transform_5(%arg0: i32) -> (i32, i32) {
    %c0_i32 = arith.constant 0 : i32
    %c0_i32_0 = arith.constant 0 : i32
    return %arg0, %c0_i32 : i32, i32
  }
}

</mosaic_0001>

<llo_original>
// kernel: tpu_custom_call.1
$region0: #{tpu_custom_call.1}
  #allocation0 [shape = 'u32[]', space=smem, size = 0x4, offset = 0x4, fixed_abs, tag = 'smem constant byte address 0x4 - core index']
  #allocation1 [shape = 'u32[144,128]{1,0:T(1,128)}', space=vmem, size = 0x12000, scoped, tag = 'internal scratch']
  %s0 = inlined_call_operand.vmem [shape: s32[32,1], index: 0, kind: input, shape index: {}]
  %s1 = inlined_call_operand.vmem [shape: f32[32,128], index: 1, kind: input, shape index: {}]
  %s2 = inlined_call_operand.hbm [shape: f32[32,128], index: 2, kind: input, shape index: {}]
  %s3 = inlined_call_operand.vmem [shape: f32[32,1], index: 3, kind: output, shape index: {0}]
  %s4 = inlined_call_operand.vmem [shape: f32[32,1], index: 4, kind: output, shape index: {1}]
  %s5 = inlined_call_operand.vmem [shape: f32[32,1], index: 5, kind: output, shape index: {2}]
  %6 = xla_tuple %s3, %s4, %s5
  %s7 = sld [smem:[#allocation0]]
  $region65: #{tpu_custom_call.1} parent=0
    _
  %s9 = ssub.s32 1, %s7
  %s10 = scalar_select 0, %s9, %s7
  $region1: #{tpu_custom_call.1} parent=0
    #allocation2 [shape = 'u8[8192]{0}', space=vmem, size = 0x2000, scoped, tag = 'input window, operand 2']
    #allocation3 [shape = 's32[2]{0}', space=sflag, size = 0x8, scoped, tag = 'scoped memory for tpu_custom_call.1']
    %11 = vsyncpa [#allocation3], 0
    %s12 = scalar_lea.sflag [#allocation3], 1
    %13 = vsyncpa %s12, 0
    loop: start=0, step=1, limit=6
    $region2: #{tpu_custom_call.1} parent=1 // loop_pre_header
      _
    $region3: #{tpu_custom_call.1} parent=1 // loop_header
      %s15 = sphi 0, %s19
      %p16 = scmp.ge.s32.totalorder %s15, 6
      %s25 = sphi 0, %s27
      %s28 = sphi 0, %s25
      %s29 = sphi 0, %s28
      %s45 = sphi 0, %s29
      %s51 = sphi 0, %s53
      %s54 = sphi 0, %s51
      %s55 = sphi 0, %s54
      %s71 = sphi 0, %s55
      %s77 = sphi 0, %s79
      %s80 = sphi 0, %s77
      %s81 = sphi 0, %s80
      %s97 = sphi 0, %s81
      %s103 = sphi 0, %s105
      %s106 = sphi 0, %s103
      %s107 = sphi 0, %s106
      %s123 = sphi 0, %s107
      %s129 = sphi 0, %s131
      %s132 = sphi 0, %s129
      %s133 = sphi 0, %s132
      %s149 = sphi 0, %s133
      %s155 = sphi 0, %s157
      %s158 = sphi 0, %s155
      %s159 = sphi 0, %s158
      %s175 = sphi 0, %s159
    $region4: #{tpu_custom_call.1} parent=1 // loop_header_branch
      %18 = sbr.rel (%p16) target = $region8
    $region5: #{tpu_custom_call.1} parent=1 // loop_body
      %s20 = ssub.s32 %s15, 1
      %s21 = ssub.s32 %s15, 2
      %s22 = sadd.s32 %s15, 1
      %s23 = ssub.s32 %s15, %s22
      %p24 = scmp.eq.s32.totalorder %s23, 0
      %s26 = sadd.s32 %s25, 1
      %s27 = scalar_select %p24, %s25, %s26
      %p30 = pneg %p24
      %p31 = scmp.eq.s32.totalorder %s15, 3
      %p32 = por %p30, %p31
      %p33 = scmp.ne.s32.totalorder %s25, %s28
      %p34 = scmp.eq.s32.totalorder %s15, 0
      %p35 = por %p33, %p34
      %p36 = scmp.ne.s32.totalorder %s25, %s28
      %p37 = scmp.eq.s32.totalorder %s20, 3
      %p38 = por %p36, %p37
      %p39 = scmp.ne.s32.totalorder %s28, %s29
      %p40 = scmp.eq.s32.totalorder %s20, 0
      %p41 = por %p39, %p40
      %p42 = scmp.ne.s32.totalorder %s28, %s29
      %p43 = scmp.eq.s32.totalorder %s21, 3
      %p44 = por %p42, %p43
      %p46 = scmp.ne.s32.totalorder %s29, %s45
      %p47 = scmp.eq.s32.totalorder %s21, 0
      %p48 = por %p46, %p47
      %s49 = ssub.s32 %s15, %s22
      %p50 = scmp.eq.s32.totalorder %s49, 0
      %s52 = sadd.s32 %s51, 1
      %s53 = scalar_select %p50, %s51, %s52
      %p56 = pneg %p50
      %p57 = scmp.eq.s32.totalorder %s15, 3
      %p58 = por %p56, %p57
      %p59 = scmp.ne.s32.totalorder %s51, %s54
      %p60 = scmp.eq.s32.totalorder %s15, 0
      %p61 = por %p59, %p60
      %p62 = scmp.ne.s32.totalorder %s51, %s54
      %p63 = scmp.eq.s32.totalorder %s20, 3
      %p64 = por %p62, %p63
      %p65 = scmp.ne.s32.totalorder %s54, %s55
      %p66 = scmp.eq.s32.totalorder %s20, 0
      %p67 = por %p65, %p66
      %p68 = scmp.ne.s32.totalorder %s54, %s55
      %p69 = scmp.eq.s32.totalorder %s21, 3
      %p70 = por %p68, %p69
      %p72 = scmp.ne.s32.totalorder %s55, %s71
      %p73 = scmp.eq.s32.totalorder %s21, 0
      %p74 = por %p72, %p73
      %s75 = ssub.s32 %s15, %s22
      %p76 = scmp.eq.s32.totalorder %s75, 0
      %s78 = sadd.s32 %s77, 1
      %s79 = scalar_select %p76, %s77, %s78
      %p82 = pneg %p76
      %p83 = scmp.eq.s32.totalorder %s15, 3
      %p84 = por %p82, %p83
      %p85 = scmp.ne.s32.totalorder %s77, %s80
      %p86 = scmp.eq.s32.totalorder %s15, 0
      %p87 = por %p85, %p86
      %p88 = scmp.ne.s32.totalorder %s77, %s80
      %p89 = scmp.eq.s32.totalorder %s20, 3
      %p90 = por %p88, %p89
      %p91 = scmp.ne.s32.totalorder %s80, %s81
      %p92 = scmp.eq.s32.totalorder %s20, 0
      %p93 = por %p91, %p92
      %p94 = scmp.ne.s32.totalorder %s80, %s81
      %p95 = scmp.eq.s32.totalorder %s21, 3
      %p96 = por %p94, %p95
      %p98 = scmp.ne.s32.totalorder %s81, %s97
      %p99 = scmp.eq.s32.totalorder %s21, 0
      %p100 = por %p98, %p99
      %s101 = ssub.s32 %s15, %s22
      %p102 = scmp.eq.s32.totalorder %s101, 0
      %s104 = sadd.s32 %s103, 1
      %s105 = scalar_select %p102, %s103, %s104
      %p108 = pneg %p102
      %p109 = scmp.eq.s32.totalorder %s15, 3
      %p110 = por %p108, %p109
      %p111 = scmp.ne.s32.totalorder %s103, %s106
      %p112 = scmp.eq.s32.totalorder %s15, 0
      %p113 = por %p111, %p112
      %p114 = scmp.ne.s32.totalorder %s103, %s106
      %p115 = scmp.eq.s32.totalorder %s20, 3
      %p116 = por %p114, %p115
      %p117 = scmp.ne.s32.totalorder %s106, %s107
      %p118 = scmp.eq.s32.totalorder %s20, 0
      %p119 = por %p117, %p118
      %p120 = scmp.ne.s32.totalorder %s106, %s107
      %p121 = scmp.eq.s32.totalorder %s21, 3
      %p122 = por %p120, %p121
      %p124 = scmp.ne.s32.totalorder %s107, %s123
      %p125 = scmp.eq.s32.totalorder %s21, 0
      %p126 = por %p124, %p125
      %s127 = ssub.s32 %s15, %s22
      %p128 = scmp.eq.s32.totalorder %s127, 0
      %s130 = sadd.s32 %s129, 1
      %s131 = scalar_select %p128, %s129, %s130
      %p134 = pneg %p128
      %p135 = scmp.eq.s32.totalorder %s15, 3
      %p136 = por %p134, %p135
      %p137 = scmp.ne.s32.totalorder %s129, %s132
      %p138 = scmp.eq.s32.totalorder %s15, 0
      %p139 = por %p137, %p138
      %p140 = scmp.ne.s32.totalorder %s129, %s132
      %p141 = scmp.eq.s32.totalorder %s20, 3
      %p142 = por %p140, %p141
      %p143 = scmp.ne.s32.totalorder %s132, %s133
      %p144 = scmp.eq.s32.totalorder %s20, 0
      %p145 = por %p143, %p144
      %p146 = scmp.ne.s32.totalorder %s132, %s133
      %p147 = scmp.eq.s32.totalorder %s21, 3
      %p148 = por %p146, %p147
      %p150 = scmp.ne.s32.totalorder %s133, %s149
      %p151 = scmp.eq.s32.totalorder %s21, 0
      %p152 = por %p150, %p151
      %s153 = ssub.s32 %s15, %s22
      %p154 = scmp.eq.s32.totalorder %s153, 0
      %s156 = sadd.s32 %s155, 1
      %s157 = scalar_select %p154, %s155, %s156
      %p160 = pneg %p154
      %p161 = scmp.eq.s32.totalorder %s15, 3
      %p162 = por %p160, %p161
      %p163 = scmp.ne.s32.totalorder %s155, %s158
      %p164 = scmp.eq.s32.totalorder %s15, 0
      %p165 = por %p163, %p164
      %p166 = scmp.ne.s32.totalorder %s155, %s158
      %p167 = scmp.eq.s32.totalorder %s20, 3
      %p168 = por %p166, %p167
      %p169 = scmp.ne.s32.totalorder %s158, %s159
      %p170 = scmp.eq.s32.totalorder %s20, 0
      %p171 = por %p169, %p170
      %p172 = scmp.ne.s32.totalorder %s158, %s159
      %p173 = scmp.eq.s32.totalorder %s21, 3
      %p174 = por %p172, %p173
      %p176 = scmp.ne.s32.totalorder %s159, %s175
      %p177 = scmp.eq.s32.totalorder %s21, 0
      %p178 = por %p176, %p177
      %p179 = scmp.le.s32.totalorder 1, %s15
      %p180 = scmp.lt.s32.totalorder %s15, 5
      %p181 = pnand %p179, %p180
      %p182 = pneg %p181
      // Predicated region
      $region9: #{tpu_custom_call.1} parent=5 // pred_check
        _
      $region10: #{tpu_custom_call.1} parent=5 // pred_check_branch
        %184 = sbr.rel (%p181) target = $region12
      $region11: #{tpu_custom_call.1} parent=5 // pred_region
        %s185 = ssub.s32 %s15, 1
      $region12: #{tpu_custom_call.1} parent=5 // pred_fallthru
        _
      %p186 = scmp.lt.s32.totalorder %s15, 4
      // Predicated region
      $region13: #{tpu_custom_call.1} parent=5 // pred_check
        %p187 = pneg %p186
      $region14: #{tpu_custom_call.1} parent=5 // pred_check_branch
        %189 = sbr.rel (%p187) target = $region16
      $region15: #{tpu_custom_call.1} parent=5 // pred_region
        // Predicated region
        $region17: #{tpu_custom_call.1} parent=15 // pred_check
          %p190 = pneg %p35
        $region18: #{tpu_custom_call.1} parent=15 // pred_check_branch
          %192 = sbr.rel (%p190) target = $region20
        $region19: #{tpu_custom_call.1} parent=15 // pred_region
          %p193 = scmp.lt.s32.totalorder %s15, 3
          %s194 = scalar_select %p193, %s15, 3
          %s195 = smul.addr %s194, 8
          %s196 = scalar_lea.vmem %s0, %s195
        $region20: #{tpu_custom_call.1} parent=15 // pred_fallthru
          _
        // Predicated region
        $region21: #{tpu_custom_call.1} parent=15 // pred_check
          %p197 = pneg %p61
        $region22: #{tpu_custom_call.1} parent=15 // pred_check_branch
          %199 = sbr.rel (%p197) target = $region24
        $region23: #{tpu_custom_call.1} parent=15 // pred_region
          %p200 = scmp.lt.s32.totalorder %s15, 3
          %s201 = scalar_select %p200, %s15, 3
          %s202 = smul.addr %s201, 8
          %s203 = scalar_lea.vmem %s1, %s202
        $region24: #{tpu_custom_call.1} parent=15 // pred_fallthru
          _
        // Predicated region
        $region25: #{tpu_custom_call.1} parent=15 // pred_check
          %p204 = pneg %p87
        $region26: #{tpu_custom_call.1} parent=15 // pred_check_branch
          %206 = sbr.rel (%p204) target = $region28
        $region27: #{tpu_custom_call.1} parent=15 // pred_region
          %s207 = sand.u32 %s77, 1
          %s208 = scalar_lea.sflag [#allocation3], %s207
          %s209 = sand.u32 %s77, 1
          %s210 = smul.addr %s209, 8
          %s211 = scalar_lea.vmem [#allocation2], %s210
          %s213 = ssub.s32 128, 128
          %214 = vsyncadd %s208, %s213
          %s215 = smul.addr %s15, 128
          %s216 = scalar_lea.hbm %s2, %s215
          %s218 = sshll.u32 %s211, 4
          %s219 = int_to_ptr.vmem [resolvable:$true] %s218
          %221 = dma.hbm_to_vmem [thread:$0]  %s216, 128, %s219, %s208
        $region28: #{tpu_custom_call.1} parent=15 // pred_fallthru
          _
      $region16: #{tpu_custom_call.1} parent=5 // pred_fallthru
        _
      %p222 = scmp.le.s32.totalorder 1, %s15
      %p223 = scmp.lt.s32.totalorder %s15, 5
      %p224 = pnand %p222, %p223
      %p225 = pneg %p224
      // Predicated region
      $region29: #{tpu_custom_call.1} parent=5 // pred_check
        _
      $region30: #{tpu_custom_call.1} parent=5 // pred_check_branch
        %227 = sbr.rel (%p224) target = $region32
      $region31: #{tpu_custom_call.1} parent=5 // pred_region
        %s228 = ssub.s32 %s15, 1
        %s229 = sand.u32 %s80, 1
        %s230 = scalar_lea.sflag [#allocation3], %s229
        %s231 = sand.u32 %s80, 1
        %s232 = smul.addr %s231, 8
        %s233 = scalar_lea.vmem [#allocation2], %s232
        // Predicated region
        $region33: #{tpu_custom_call.1} parent=31 // pred_check
          %p234 = pneg %p93
        $region34: #{tpu_custom_call.1} parent=31 // pred_check_branch
          %236 = sbr.rel (%p234) target = $region36
        $region35: #{tpu_custom_call.1} parent=31 // pred_region
          %237 = dma.done %s230, 128
        $region36: #{tpu_custom_call.1} parent=31 // pred_fallthru
          _
        %p238 = scmp.lt.s32.totalorder %s20, 3
        %s239 = scalar_select %p238, %s20, 3
        %s240 = smul.addr %s239, 8
        %s241 = scalar_lea.vmem %s0, %s240
        %p242 = pneg %p41
        %p243 = pneg %p38
        %p244 = scmp.lt.s32.totalorder %s20, 3
        %s245 = scalar_select %p244, %s20, 3
        %s246 = smul.addr %s245, 8
        %s247 = scalar_lea.vmem %s1, %s246
        %p248 = pneg %p67
        %p249 = pneg %p64
        %s250 = sand.u32 %s80, 1
        %s251 = scalar_lea.sflag [#allocation3], %s250
        %s252 = sand.u32 %s80, 1
        %s253 = smul.addr %s252, 8
        %s254 = scalar_lea.vmem [#allocation2], %s253
        %p255 = pneg %p93
        %p256 = pneg %p90
        %p257 = pneg %p119
        %p258 = pneg %p116
        %p259 = scmp.lt.s32.totalorder %s20, 3
        %s260 = scalar_select %p259, %s20, 3
        %s261 = smul.addr %s260, 8
        %s262 = scalar_lea.vmem %s3, %s261
        %p263 = pneg %p145
        %p264 = pneg %p142
        %p265 = scmp.lt.s32.totalorder %s20, 3
        %s266 = scalar_select %p265, %s20, 3
        %s267 = smul.addr %s266, 8
        %s268 = scalar_lea.vmem %s4, %s267
        %p269 = pneg %p171
        %p270 = pneg %p168
        %p271 = scmp.lt.s32.totalorder %s20, 3
        %s272 = scalar_select %p271, %s20, 3
        %s273 = smul.addr %s272, 8
        %s274 = scalar_lea.vmem %s5, %s273
        %p275 = scmp.lt.s32.totalorder %s20, 3
        %s276 = scalar_select %p275, %s20, 3
        %s277 = smul.addr %s276, 8
        %s278 = scalar_lea.vmem %s0, %s277
        %p279 = scmp.lt.s32.totalorder %s20, 3
        %s280 = scalar_select %p279, %s20, 3
        %s281 = smul.addr %s280, 8
        %s282 = scalar_lea.vmem %s1, %s281
        %p283 = scmp.lt.s32.totalorder %s20, 3
        %s284 = scalar_select %p283, %s20, 3
        %s285 = smul.addr %s284, 8
        %s286 = scalar_lea.vmem %s3, %s285
        %p287 = scmp.lt.s32.totalorder %s20, 3
        %s288 = scalar_select %p287, %s20, 3
        %s289 = smul.addr %s288, 8
        %s290 = scalar_lea.vmem %s4, %s289
        %p291 = scmp.lt.s32.totalorder %s20, 3
        %s292 = scalar_select %p291, %s20, 3
        %s293 = smul.addr %s292, 8
        %s294 = scalar_lea.vmem %s5, %s293
        %v295 = vld [vmem:[%s282] sm:$0xff]
        %v296 = vld [vmem:[%s233] sm:$0xff]
        %v297 = vld [vmem:[%s278] sm:$0xff]
        %v298 = vlaneseq
        %v299 = vand.u32 %v298, 127
        %300 = vset.pattern.permute.xlu0 0
        %301 = vperm.xlu0 %300, %v297
        %v302 = vpop.permute.xlu0 %301
        %vm303 = vcmp.eq.s32.totalorder %v299, %v302
        %304 = vmax.xlane.f32.xlu0 %v296
        %v305 = vpop.xlane.xlu0 %304
        %v306 = vsub.f32 %v296, %v305
        %v307 = vmul.f32 %v306, 1.442695
        %v308 = vpow.pop %v307
        %309 = vadd.xlane.f32.xlu0 %v308
        %v310 = vpop.xlane.xlu0 %309
        %v311 = vsel %vm303, %v308, 0.0
        %312 = vadd.xlane.f32.xlu0 %v311
        %v313 = vpop.xlane.xlu0 %312
        %v314 = vrcp.pop %v310
        %v315 = vmul.f32 %v313, %v314
        %vm316 = vcmask 7168
        %317 = vst.msk [vmem:[%s286] sm:$0xff] %vm316, %v315
        %v318 = vmul.f32 %v296, 0.5
        %319 = vmax.xlane.f32.xlu0 %v318
        %v320 = vpop.xlane.xlu0 %319
        %v321 = vsub.f32 %v318, %v320
        %v322 = vmul.f32 %v321, 1.442695
        %v323 = vpow.pop %v322
        %324 = vadd.xlane.f32.xlu0 %v323
        %v325 = vpop.xlane.xlu0 %324
        %v326 = vsel %vm303, %v323, 0.0
        %327 = vadd.xlane.f32.xlu0 %v326
        %v328 = vpop.xlane.xlu0 %327
        %v329 = vmul.f32 %v295, 0.5
        %330 = vmax.xlane.f32.xlu0 %v329
        %v331 = vpop.xlane.xlu0 %330
        %v332 = vsub.f32 %v329, %v331
        %v333 = vmul.f32 %v332, 1.442695
        %v334 = vpow.pop %v333
        %335 = vadd.xlane.f32.xlu0 %v334
        %v336 = vpop.xlane.xlu0 %335
        %v337 = vsel %vm303, %v334, 0.0
        %338 = vadd.xlane.f32.xlu0 %v337
        %v339 = vpop.xlane.xlu0 %338
        %v340 = vrcp.pop %v325
        %v341 = vmul.f32 %v328, %v340
        %v342 = vsub.f32 %v325, %v328
        %v343 = vmul.f32 %v342, %v340
        %v344 = vrcp.pop %v336
        %v345 = vmul.f32 %v339, %v344
        %v346 = vsub.f32 %v336, %v339
        %v347 = vmul.f32 %v346, %v344
        %vm348 = vcmp.gt.f32.partialorder %v341, 0.0
        %v349 = vlog2.pop %v341
        %v350 = vmul.f32 %v349, 0.6931472
        %v351 = vlog2.pop %v345
        %v352 = vmul.f32 %v351, 0.6931472
        %v353 = vsub.f32 %v350, %v352
        %v354 = vmul.f32 %v341, %v353
        %v355 = vsel %vm348, %v354, 0.0
        %vm356 = vcmp.gt.f32.partialorder %v343, 0.0
        %v357 = vlog2.pop %v343
        %v358 = vmul.f32 %v357, 0.6931472
        %v359 = vlog2.pop %v347
        %v360 = vmul.f32 %v359, 0.6931472
        %v361 = vsub.f32 %v358, %v360
        %v362 = vmul.f32 %v343, %v361
        %v363 = vsel %vm356, %v362, 0.0
        %v364 = vadd.f32 %v355, %v363
        %v365 = vmul.f32 %v364, 0.125
        %366 = vst.msk [vmem:[%s290] sm:$0xff] %vm316, %v365
        %v367 = vmul.f32 %v296, 0.25
        %v368 = vsel %vm303, -inf, %v367
        %369 = vmax.xlane.f32.xlu0 %v368
        %v370 = vpop.xlane.xlu0 %369
        %v371 = vsub.f32 %v367, %v370
        %v372 = vmul.f32 %v371, 1.442695
        %v373 = vpow.pop %v372
        %v374 = vsel %vm303, 0.0, %v373
        %375 = vadd.xlane.f32.xlu0 %v374
        %v376 = vpop.xlane.xlu0 %375
        %v377 = vmul.f32 %v295, 0.25
        %v378 = vsel %vm303, -inf, %v377
        %379 = vmax.xlane.f32.xlu0 %v378
        %v380 = vpop.xlane.xlu0 %379
        %v381 = vsub.f32 %v377, %v380
        %v382 = vmul.f32 %v381, 1.442695
        %v383 = vpow.pop %v382
        %v384 = vsel %vm303, 0.0, %v383
        %385 = vadd.xlane.f32.xlu0 %v384
        %v386 = vpop.xlane.xlu0 %385
        %v387 = vrcp.pop %v376
        %v388 = vmul.f32 1.0, %v387
        %v389 = vmul.f32 %v374, %v388
        %v390 = vsub.f32 %v371, %v381
        %v391 = vlog2.pop %v386
        %v392 = vmul.f32 %v391, 0.6931472
        %v393 = vlog2.pop %v376
        %v394 = vmul.f32 %v393, 0.6931472
        %v395 = vsub.f32 %v392, %v394
        %v396 = vadd.f32 %v390, %v395
        %vm397 = vcmp.gt.f32.partialorder %v389, 0.0
        %v398 = vmul.f32 %v389, %v396
        %v399 = vsel %vm397, %v398, 0.0
        %400 = vadd.xlane.f32.xlu0 %v399
        %v401 = vpop.xlane.xlu0 %400
        %v402 = vmul.f32 %v401, 0.5
        %403 = vst.msk [vmem:[%s294] sm:$0xff] %vm316, %v402
        %p404 = scmp.lt.s32.totalorder %s20, 3
        %s405 = scalar_select %p404, %s20, 3
        %s406 = smul.addr %s405, 8
        %s407 = scalar_lea.vmem %s3, %s406
        %p408 = scmp.lt.s32.totalorder %s20, 3
        %s409 = scalar_select %p408, %s20, 3
        %s410 = smul.addr %s409, 8
        %s411 = scalar_lea.vmem %s4, %s410
        %p412 = scmp.lt.s32.totalorder %s20, 3
        %s413 = scalar_select %p412, %s20, 3
        %s414 = smul.addr %s413, 8
        %s415 = scalar_lea.vmem %s5, %s414
        // Predicated region
        $region37: #{tpu_custom_call.1} parent=31 // pred_check
          %p416 = pneg %p116
        $region38: #{tpu_custom_call.1} parent=31 // pred_check_branch
          %418 = sbr.rel (%p416) target = $region40
        $region39: #{tpu_custom_call.1} parent=31 // pred_region
          _
        $region40: #{tpu_custom_call.1} parent=31 // pred_fallthru
          _
        // Predicated region
        $region41: #{tpu_custom_call.1} parent=31 // pred_check
          %p419 = pneg %p142
        $region42: #{tpu_custom_call.1} parent=31 // pred_check_branch
          %421 = sbr.rel (%p419) target = $region44
        $region43: #{tpu_custom_call.1} parent=31 // pred_region
          _
        $region44: #{tpu_custom_call.1} parent=31 // pred_fallthru
          _
        // Predicated region
        $region45: #{tpu_custom_call.1} parent=31 // pred_check
          %p422 = pneg %p168
        $region46: #{tpu_custom_call.1} parent=31 // pred_check_branch
          %424 = sbr.rel (%p422) target = $region48
        $region47: #{tpu_custom_call.1} parent=31 // pred_region
          _
        $region48: #{tpu_custom_call.1} parent=31 // pred_fallthru
          _
      $region32: #{tpu_custom_call.1} parent=5 // pred_fallthru
        _
      %p425 = scmp.le.s32.totalorder 2, %s15
      // Predicated region
      $region49: #{tpu_custom_call.1} parent=5 // pred_check
        %p426 = pneg %p425
      $region50: #{tpu_custom_call.1} parent=5 // pred_check_branch
        %428 = sbr.rel (%p426) target = $region52
      $region51: #{tpu_custom_call.1} parent=5 // pred_region
        %s429 = ssub.s32 %s15, 2
        // Predicated region
        $region53: #{tpu_custom_call.1} parent=51 // pred_check
          %p430 = pneg %p122
        $region54: #{tpu_custom_call.1} parent=51 // pred_check_branch
          %432 = sbr.rel (%p430) target = $region56
        $region55: #{tpu_custom_call.1} parent=51 // pred_region
          %p433 = scmp.lt.s32.totalorder %s21, 3
          %s434 = scalar_select %p433, %s21, 3
          %s435 = smul.addr %s434, 8
          %s436 = scalar_lea.vmem %s3, %s435
        $region56: #{tpu_custom_call.1} parent=51 // pred_fallthru
          _
        // Predicated region
        $region57: #{tpu_custom_call.1} parent=51 // pred_check
          %p437 = pneg %p148
        $region58: #{tpu_custom_call.1} parent=51 // pred_check_branch
          %439 = sbr.rel (%p437) target = $region60
        $region59: #{tpu_custom_call.1} parent=51 // pred_region
          %p440 = scmp.lt.s32.totalorder %s21, 3
          %s441 = scalar_select %p440, %s21, 3
          %s442 = smul.addr %s441, 8
          %s443 = scalar_lea.vmem %s4, %s442
        $region60: #{tpu_custom_call.1} parent=51 // pred_fallthru
          _
        // Predicated region
        $region61: #{tpu_custom_call.1} parent=51 // pred_check
          %p444 = pneg %p174
        $region62: #{tpu_custom_call.1} parent=51 // pred_check_branch
          %446 = sbr.rel (%p444) target = $region64
        $region63: #{tpu_custom_call.1} parent=51 // pred_region
          %p447 = scmp.lt.s32.totalorder %s21, 3
          %s448 = scalar_select %p447, %s21, 3
          %s449 = smul.addr %s448, 8
          %s450 = scalar_lea.vmem %s5, %s449
        $region64: #{tpu_custom_call.1} parent=51 // pred_fallthru
          _
      $region52: #{tpu_custom_call.1} parent=5 // pred_fallthru
        _
    $region6: #{tpu_custom_call.1} parent=1 // loop_footer
      %s19 = sadd.s32 1, %s15
    $region7: #{tpu_custom_call.1} parent=1 // loop_footer_branch
      %14 = sbr.rel target = $region3
    $region8: #{tpu_custom_call.1} parent=1 // loop_exit
      _
    %451 = vsyncpa [#allocation3], 1
    %s452 = scalar_lea.sflag [#allocation3], 1
    %453 = vsyncpa %s452, 1

</llo_original>
